<compile_context>
chip_gen: v5e
topology: v5e:2x2
jax: 0.10.0
libtpu: 0.0.40
codegen_flags: <defaults>
</compile_context>

<pallas_src>
import numpy as np
import jax
import jax.numpy as jnp
from jax import lax
from jax.experimental import pallas as pl
from jax.experimental.pallas import tpu as pltpu

H = 50       # hidden_layer_size
GP = 128     # padded gate-block / hidden lane width (one full vreg of lanes)


def lstm_kernel(xv_ref, wih_ref, whh_ref, b_ref, wlin_ref, blin_ref,
                out_ref, pre_ref):
    # xv_ref:   (L, 1)      VMEM  - scalar inputs per timestep (input_size==1)
    # wih_ref:  (1, 4*GP)   VMEM  - input->gates weights, gate-padded
    # whh_ref:  (GP, 4*GP)  VMEM  - hidden->gates weights (transposed, padded)
    # b_ref:    (1, 4*GP)   VMEM  - b_ih + b_hh, gate-padded
    # wlin_ref: (1, GP)     VMEM  - final linear weight row, padded
    # blin_ref: (1,)        SMEM  - final linear bias
    # out_ref:  (1,)        SMEM  - scalar prediction
    # pre_ref:  (L, 4*GP)   VMEM  - scratch: per-step input + bias contribution
    L = xv_ref.shape[0]

    whh = whh_ref[...]

    # Hoist the loop-independent input term off the serial recurrence:
    # pre[t, :] = x_t * W_ih + (b_ih + b_hh)      (one broadcast-mul + add)
    pre_ref[...] = xv_ref[...] * wih_ref[...] + b_ref[...]

    # Per-gate affine constants so a single tanh over (1, 4*GP) yields
    # sigmoid for the i/f/o blocks and tanh for the g block:
    #   sigmoid(z) = 0.5 * tanh(0.5 * z) + 0.5
    lane = lax.broadcasted_iota(jnp.int32, (1, 4 * GP), 1)
    is_g = (lane >= 2 * GP) & (lane < 3 * GP)
    gate_scale = jnp.where(is_g, 1.0, 0.5).astype(jnp.float32)  # pre & post mul
    gate_shift = jnp.where(is_g, 0.0, 0.5).astype(jnp.float32)  # post add

    h0 = jnp.zeros((1, GP), jnp.float32)
    c0 = jnp.zeros((1, GP), jnp.float32)

    def step(t, carry):
        h, c = carry
        gates = (pre_ref[pl.ds(t, 1), :]
                 + jnp.dot(h, whh, preferred_element_type=jnp.float32))
        # Single EUP pass over both gate vregs, then cheap VPU affine.
        act = gate_scale * jnp.tanh(gate_scale * gates) + gate_shift
        i = act[:, 0 * GP:1 * GP]
        f = act[:, 1 * GP:2 * GP]
        g = act[:, 2 * GP:3 * GP]
        o = act[:, 3 * GP:4 * GP]
        c_new = f * c + i * g
        h_new = o * jnp.tanh(c_new)
        return (h_new, c_new)

    # Fully unrolled recurrence (L is small and static) so the scheduler can
    # overlap the MXU drain of step t with the VPU/EUP tail of step t-1.
    h, c = lax.fori_loop(0, L, step, (h0, c0), unroll=True)

    pred = jnp.sum(h * wlin_ref[...]) + blin_ref[0]
    out_ref[0] = pred


def lstm_forward(xv, wih_p, whh_p, b_p, wlin_p, blin):
    L = xv.shape[0]
    out = pl.pallas_call(
        lstm_kernel,
        out_shape=jax.ShapeDtypeStruct((1,), jnp.float32),
        in_specs=[
            pl.BlockSpec(memory_space=pltpu.MemorySpace.VMEM),   # x (L,1)
            pl.BlockSpec(memory_space=pltpu.MemorySpace.VMEM),   # W_ih (padded)
            pl.BlockSpec(memory_space=pltpu.MemorySpace.VMEM),   # W_hh (padded, transposed)
            pl.BlockSpec(memory_space=pltpu.MemorySpace.VMEM),   # bias
            pl.BlockSpec(memory_space=pltpu.MemorySpace.VMEM),   # W_lin
            pl.BlockSpec(memory_space=pltpu.MemorySpace.SMEM),   # b_lin
        ],
        out_specs=pl.BlockSpec(memory_space=pltpu.MemorySpace.SMEM),
        scratch_shapes=[pltpu.VMEM((L, 4 * GP), jnp.float32)],   # pre-computed gates
    )(xv, wih_p, whh_p, b_p, wlin_p, blin)
    return out[0]


def _ref_forward(x, W_ih, W_hh, b_ih, b_hh, W_lin, b_lin):
    """Pure numpy reference replicating torch.nn.LSTM + Linear forward."""
    def sig(z):
        return 1.0 / (1.0 + np.exp(-z))
    h = np.zeros((H,), np.float32)
    c = np.zeros((H,), np.float32)
    for t in range(x.shape[0]):
        gates = W_ih[:, 0] * x[t] + W_hh @ h + b_ih + b_hh
        i = sig(gates[0 * H:1 * H])
        f = sig(gates[1 * H:2 * H])
        g = np.tanh(gates[2 * H:3 * H])
        o = sig(gates[3 * H:4 * H])
        c = f * c + i * g
        h = o * np.tanh(c)
    out = W_lin @ h + b_lin          # shape (1,)
    return float(out[0])


if __name__ == "__main__":
    L = 8  # sequence length

    key = jax.random.PRNGKey(0)
    k_x, k1, k2, k3, k4, k5, k6 = jax.random.split(key, 7)

    # Deterministic parameter init mimicking PyTorch uniform(-1/sqrt(H), 1/sqrt(H)).
    bound = 1.0 / np.sqrt(H)
    W_ih = np.asarray(jax.random.uniform(k1, (4 * H, 1), jnp.float32, -bound, bound))
    W_hh = np.asarray(jax.random.uniform(k2, (4 * H, H), jnp.float32, -bound, bound))
    b_ih = np.asarray(jax.random.uniform(k3, (4 * H,), jnp.float32, -bound, bound))
    b_hh = np.asarray(jax.random.uniform(k4, (4 * H,), jnp.float32, -bound, bound))
    W_lin = np.asarray(jax.random.uniform(k5, (1, H), jnp.float32, -bound, bound))
    b_lin = np.asarray(jax.random.uniform(k6, (1,), jnp.float32, -bound, bound))

    # Pack / pad weights for the kernel: gate order (i, f, g, o), each gate
    # block padded from H=50 to GP=128 lanes; padded entries are zero.
    wih_p = np.zeros((1, 4 * GP), np.float32)
    whh_p = np.zeros((GP, 4 * GP), np.float32)
    b_p = np.zeros((1, 4 * GP), np.float32)
    wlin_p = np.zeros((1, GP), np.float32)
    b_sum = b_ih + b_hh
    for g in range(4):
        wih_p[0, g * GP:g * GP + H] = W_ih[g * H:(g + 1) * H, 0]
        whh_p[:H, g * GP:g * GP + H] = W_hh[g * H:(g + 1) * H, :].T
        b_p[0, g * GP:g * GP + H] = b_sum[g * H:(g + 1) * H]
    wlin_p[0, :H] = W_lin[0, :]

    # Example input sequence (input_seq of length L, input_size=1).
    x = np.asarray(jax.random.normal(k_x, (L,), jnp.float32))
    xv = x.reshape(L, 1)

    pred = lstm_forward(
        jnp.asarray(xv),
        jnp.asarray(wih_p),
        jnp.asarray(whh_p),
        jnp.asarray(b_p),
        jnp.asarray(wlin_p),
        jnp.asarray(b_lin),
    )
    pred = jax.block_until_ready(pred)

    ref = _ref_forward(x, W_ih, W_hh, b_ih, b_hh, W_lin, b_lin)
    np.testing.assert_allclose(np.asarray(pred), ref, rtol=1e-4, atol=1e-5)

    print("KERNEL_OK")
</pallas_src>

<mosaic_0001>
module attributes {stable_mosaic.version = 11 : i64} {
  func.func @lstm_kernel(%arg0: memref<8x1xf32, #tpu.memory_space<vmem>>, %arg1: memref<1x512xf32, #tpu.memory_space<vmem>>, %arg2: memref<128x512xf32, #tpu.memory_space<vmem>>, %arg3: memref<1x512xf32, #tpu.memory_space<vmem>>, %arg4: memref<1x128xf32, #tpu.memory_space<vmem>>, %arg5: memref<1xf32, #tpu.memory_space<smem>>, %arg6: memref<1xf32, #tpu.memory_space<smem>>, %arg7: memref<8x512xf32, #tpu.memory_space<vmem>>) attributes {dimension_semantics = [], scalar_prefetch = 0 : i64, scratch_operands = 1 : i64, tpu.core_type = #tpu.core_type<tc>} {
    %c0 = arith.constant 0 : index
    %c0_0 = arith.constant 0 : index
    %0 = vector.load %arg2[%c0, %c0_0] : memref<128x512xf32, #tpu.memory_space<vmem>>, vector<128x512xf32>
    %c0_1 = arith.constant 0 : index
    %c0_2 = arith.constant 0 : index
    %1 = vector.load %arg0[%c0_1, %c0_2] : memref<8x1xf32, #tpu.memory_space<vmem>>, vector<8x1xf32>
    %c0_3 = arith.constant 0 : index
    %c0_4 = arith.constant 0 : index
    %2 = vector.load %arg1[%c0_3, %c0_4] : memref<1x512xf32, #tpu.memory_space<vmem>>, vector<1x512xf32>
    %3 = vector.broadcast %1 : vector<8x1xf32> to vector<8x512xf32>
    %4 = vector.broadcast %2 : vector<1x512xf32> to vector<8x512xf32>
    %5 = arith.mulf %3, %4 : vector<8x512xf32>
    %c0_5 = arith.constant 0 : index
    %c0_6 = arith.constant 0 : index
    %6 = vector.load %arg3[%c0_5, %c0_6] : memref<1x512xf32, #tpu.memory_space<vmem>>, vector<1x512xf32>
    %7 = vector.broadcast %6 : vector<1x512xf32> to vector<8x512xf32>
    %8 = arith.addf %5, %7 : vector<8x512xf32>
    %c0_7 = arith.constant 0 : index
    %c0_8 = arith.constant 0 : index
    %9 = vector.load %arg7[%c0_7, %c0_8] : memref<8x512xf32, #tpu.memory_space<vmem>>, vector<8x512xf32>
    tpu.vector_store %arg7[%c0_7, %c0_8], %8 {strides = array<i32>} : memref<8x512xf32, #tpu.memory_space<vmem>>, vector<8x512xf32>,
    %10 = tpu.iota {dimensions = array<i32: 1>} : vector<1x512xi32>
    %c256_i32 = arith.constant 256 : i32
    %11 = vector.broadcast %c256_i32 : i32 to vector<1x512xi32>
    %12 = arith.cmpi sge, %10, %11 : vector<1x512xi32>
    %c384_i32 = arith.constant 384 : i32
    %13 = vector.broadcast %c384_i32 : i32 to vector<1x512xi32>
    %14 = arith.cmpi slt, %10, %13 : vector<1x512xi32>
    %15 = arith.andi %12, %14 : vector<1x512xi1>
    %cst = arith.constant 1.000000e+00 : f32
    %cst_9 = arith.constant 5.000000e-01 : f32
    %16 = vector.broadcast %cst : f32 to vector<1x512xf32>
    %17 = vector.broadcast %cst_9 : f32 to vector<1x512xf32>
    %18 = arith.select %15, %16, %17 : vector<1x512xi1>, vector<1x512xf32>
    %cst_10 = arith.constant 0.000000e+00 : f32
    %cst_11 = arith.constant 5.000000e-01 : f32
    %19 = vector.broadcast %cst_10 : f32 to vector<1x512xf32>
    %20 = vector.broadcast %cst_11 : f32 to vector<1x512xf32>
    %21 = arith.select %15, %19, %20 : vector<1x512xi1>, vector<1x512xf32>
    %cst_12 = arith.constant 0.000000e+00 : f32
    %22 = vector.broadcast %cst_12 : f32 to vector<1x128xf32>
    %cst_13 = arith.constant 0.000000e+00 : f32
    %23 = vector.broadcast %cst_13 : f32 to vector<1x128xf32>
    %c0_i32 = arith.constant 0 : i32
    %24 = arith.index_cast %c0_i32 : i32 to index
    %c0_14 = arith.constant 0 : index
    %25 = vector.load %arg7[%24, %c0_14] : memref<8x512xf32, #tpu.memory_space<vmem>>, vector<1x512xf32>
    %cst_15 = arith.constant dense<0.000000e+00> : vector<1x512xf32>
    %26 = tpu.matmul %22, %0, %cst_15 {dimension_numbers = #tpu.dot_dimension_numbers<[1], [0], [0], [1], [0, 0, 1, 1], [], []>} : vector<1x128xf32>, vector<128x512xf32>, vector<1x512xf32> -> vector<1x512xf32>
    %27 = arith.addf %25, %26 : vector<1x512xf32>
    %28 = arith.mulf %18, %27 : vector<1x512xf32>
    %29 = math.tanh %28 : vector<1x512xf32>
    %30 = arith.mulf %18, %29 : vector<1x512xf32>
    %31 = arith.addf %30, %21 : vector<1x512xf32>
    %32 = vector.extract_strided_slice %31 {offsets = [0, 0], sizes = [1, 128], strides = [1, 1]} : vector<1x512xf32> to vector<1x128xf32>
    %33 = vector.extract_strided_slice %31 {offsets = [0, 128], sizes = [1, 128], strides = [1, 1]} : vector<1x512xf32> to vector<1x128xf32>
    %34 = vector.extract_strided_slice %31 {offsets = [0, 256], sizes = [1, 128], strides = [1, 1]} : vector<1x512xf32> to vector<1x128xf32>
    %35 = vector.extract_strided_slice %31 {offsets = [0, 384], sizes = [1, 128], strides = [1, 1]} : vector<1x512xf32> to vector<1x128xf32>
    %36 = arith.mulf %33, %23 : vector<1x128xf32>
    %37 = arith.mulf %32, %34 : vector<1x128xf32>
    %38 = arith.addf %36, %37 : vector<1x128xf32>
    %39 = math.tanh %38 : vector<1x128xf32>
    %40 = arith.mulf %35, %39 : vector<1x128xf32>
    %c1_i32 = arith.constant 1 : i32
    %41 = arith.index_cast %c1_i32 : i32 to index
    %c0_16 = arith.constant 0 : index
    %42 = vector.load %arg7[%41, %c0_16] : memref<8x512xf32, #tpu.memory_space<vmem>>, vector<1x512xf32>
    %cst_17 = arith.constant dense<0.000000e+00> : vector<1x512xf32>
    %43 = tpu.matmul %40, %0, %cst_17 {dimension_numbers = #tpu.dot_dimension_numbers<[1], [0], [0], [1], [0, 0, 1, 1], [], []>} : vector<1x128xf32>, vector<128x512xf32>, vector<1x512xf32> -> vector<1x512xf32>
    %44 = arith.addf %42, %43 : vector<1x512xf32>
    %45 = arith.mulf %18, %44 : vector<1x512xf32>
    %46 = math.tanh %45 : vector<1x512xf32>
    %47 = arith.mulf %18, %46 : vector<1x512xf32>
    %48 = arith.addf %47, %21 : vector<1x512xf32>
    %49 = vector.extract_strided_slice %48 {offsets = [0, 0], sizes = [1, 128], strides = [1, 1]} : vector<1x512xf32> to vector<1x128xf32>
    %50 = vector.extract_strided_slice %48 {offsets = [0, 128], sizes = [1, 128], strides = [1, 1]} : vector<1x512xf32> to vector<1x128xf32>
    %51 = vector.extract_strided_slice %48 {offsets = [0, 256], sizes = [1, 128], strides = [1, 1]} : vector<1x512xf32> to vector<1x128xf32>
    %52 = vector.extract_strided_slice %48 {offsets = [0, 384], sizes = [1, 128], strides = [1, 1]} : vector<1x512xf32> to vector<1x128xf32>
    %53 = arith.mulf %50, %38 : vector<1x128xf32>
    %54 = arith.mulf %49, %51 : vector<1x128xf32>
    %55 = arith.addf %53, %54 : vector<1x128xf32>
    %56 = math.tanh %55 : vector<1x128xf32>
    %57 = arith.mulf %52, %56 : vector<1x128xf32>
    %c2_i32 = arith.constant 2 : i32
    %58 = arith.index_cast %c2_i32 : i32 to index
    %c0_18 = arith.constant 0 : index
    %59 = vector.load %arg7[%58, %c0_18] : memref<8x512xf32, #tpu.memory_space<vmem>>, vector<1x512xf32>
    %cst_19 = arith.constant dense<0.000000e+00> : vector<1x512xf32>
    %60 = tpu.matmul %57, %0, %cst_19 {dimension_numbers = #tpu.dot_dimension_numbers<[1], [0], [0], [1], [0, 0, 1, 1], [], []>} : vector<1x128xf32>, vector<128x512xf32>, vector<1x512xf32> -> vector<1x512xf32>
    %61 = arith.addf %59, %60 : vector<1x512xf32>
    %62 = arith.mulf %18, %61 : vector<1x512xf32>
    %63 = math.tanh %62 : vector<1x512xf32>
    %64 = arith.mulf %18, %63 : vector<1x512xf32>
    %65 = arith.addf %64, %21 : vector<1x512xf32>
    %66 = vector.extract_strided_slice %65 {offsets = [0, 0], sizes = [1, 128], strides = [1, 1]} : vector<1x512xf32> to vector<1x128xf32>
    %67 = vector.extract_strided_slice %65 {offsets = [0, 128], sizes = [1, 128], strides = [1, 1]} : vector<1x512xf32> to vector<1x128xf32>
    %68 = vector.extract_strided_slice %65 {offsets = [0, 256], sizes = [1, 128], strides = [1, 1]} : vector<1x512xf32> to vector<1x128xf32>
    %69 = vector.extract_strided_slice %65 {offsets = [0, 384], sizes = [1, 128], strides = [1, 1]} : vector<1x512xf32> to vector<1x128xf32>
    %70 = arith.mulf %67, %55 : vector<1x128xf32>
    %71 = arith.mulf %66, %68 : vector<1x128xf32>
    %72 = arith.addf %70, %71 : vector<1x128xf32>
    %73 = math.tanh %72 : vector<1x128xf32>
    %74 = arith.mulf %69, %73 : vector<1x128xf32>
    %c3_i32 = arith.constant 3 : i32
    %75 = arith.index_cast %c3_i32 : i32 to index
    %c0_20 = arith.constant 0 : index
    %76 = vector.load %arg7[%75, %c0_20] : memref<8x512xf32, #tpu.memory_space<vmem>>, vector<1x512xf32>
    %cst_21 = arith.constant dense<0.000000e+00> : vector<1x512xf32>
    %77 = tpu.matmul %74, %0, %cst_21 {dimension_numbers = #tpu.dot_dimension_numbers<[1], [0], [0], [1], [0, 0, 1, 1], [], []>} : vector<1x128xf32>, vector<128x512xf32>, vector<1x512xf32> -> vector<1x512xf32>
    %78 = arith.addf %76, %77 : vector<1x512xf32>
    %79 = arith.mulf %18, %78 : vector<1x512xf32>
    %80 = math.tanh %79 : vector<1x512xf32>
    %81 = arith.mulf %18, %80 : vector<1x512xf32>
    %82 = arith.addf %81, %21 : vector<1x512xf32>
    %83 = vector.extract_strided_slice %82 {offsets = [0, 0], sizes = [1, 128], strides = [1, 1]} : vector<1x512xf32> to vector<1x128xf32>
    %84 = vector.extract_strided_slice %82 {offsets = [0, 128], sizes = [1, 128], strides = [1, 1]} : vector<1x512xf32> to vector<1x128xf32>
    %85 = vector.extract_strided_slice %82 {offsets = [0, 256], sizes = [1, 128], strides = [1, 1]} : vector<1x512xf32> to vector<1x128xf32>
    %86 = vector.extract_strided_slice %82 {offsets = [0, 384], sizes = [1, 128], strides = [1, 1]} : vector<1x512xf32> to vector<1x128xf32>
    %87 = arith.mulf %84, %72 : vector<1x128xf32>
    %88 = arith.mulf %83, %85 : vector<1x128xf32>
    %89 = arith.addf %87, %88 : vector<1x128xf32>
    %90 = math.tanh %89 : vector<1x128xf32>
    %91 = arith.mulf %86, %90 : vector<1x128xf32>
    %c4_i32 = arith.constant 4 : i32
    %92 = arith.index_cast %c4_i32 : i32 to index
    %c0_22 = arith.constant 0 : index
    %93 = vector.load %arg7[%92, %c0_22] : memref<8x512xf32, #tpu.memory_space<vmem>>, vector<1x512xf32>
    %cst_23 = arith.constant dense<0.000000e+00> : vector<1x512xf32>
    %94 = tpu.matmul %91, %0, %cst_23 {dimension_numbers = #tpu.dot_dimension_numbers<[1], [0], [0], [1], [0, 0, 1, 1], [], []>} : vector<1x128xf32>, vector<128x512xf32>, vector<1x512xf32> -> vector<1x512xf32>
    %95 = arith.addf %93, %94 : vector<1x512xf32>
    %96 = arith.mulf %18, %95 : vector<1x512xf32>
    %97 = math.tanh %96 : vector<1x512xf32>
    %98 = arith.mulf %18, %97 : vector<1x512xf32>
    %99 = arith.addf %98, %21 : vector<1x512xf32>
    %100 = vector.extract_strided_slice %99 {offsets = [0, 0], sizes = [1, 128], strides = [1, 1]} : vector<1x512xf32> to vector<1x128xf32>
    %101 = vector.extract_strided_slice %99 {offsets = [0, 128], sizes = [1, 128], strides = [1, 1]} : vector<1x512xf32> to vector<1x128xf32>
    %102 = vector.extract_strided_slice %99 {offsets = [0, 256], sizes = [1, 128], strides = [1, 1]} : vector<1x512xf32> to vector<1x128xf32>
    %103 = vector.extract_strided_slice %99 {offsets = [0, 384], sizes = [1, 128], strides = [1, 1]} : vector<1x512xf32> to vector<1x128xf32>
    %104 = arith.mulf %101, %89 : vector<1x128xf32>
    %105 = arith.mulf %100, %102 : vector<1x128xf32>
    %106 = arith.addf %104, %105 : vector<1x128xf32>
    %107 = math.tanh %106 : vector<1x128xf32>
    %108 = arith.mulf %103, %107 : vector<1x128xf32>
    %c5_i32 = arith.constant 5 : i32
    %109 = arith.index_cast %c5_i32 : i32 to index
    %c0_24 = arith.constant 0 : index
    %110 = vector.load %arg7[%109, %c0_24] : memref<8x512xf32, #tpu.memory_space<vmem>>, vector<1x512xf32>
    %cst_25 = arith.constant dense<0.000000e+00> : vector<1x512xf32>
    %111 = tpu.matmul %108, %0, %cst_25 {dimension_numbers = #tpu.dot_dimension_numbers<[1], [0], [0], [1], [0, 0, 1, 1], [], []>} : vector<1x128xf32>, vector<128x512xf32>, vector<1x512xf32> -> vector<1x512xf32>
    %112 = arith.addf %110, %111 : vector<1x512xf32>
    %113 = arith.mulf %18, %112 : vector<1x512xf32>
    %114 = math.tanh %113 : vector<1x512xf32>
    %115 = arith.mulf %18, %114 : vector<1x512xf32>
    %116 = arith.addf %115, %21 : vector<1x512xf32>
    %117 = vector.extract_strided_slice %116 {offsets = [0, 0], sizes = [1, 128], strides = [1, 1]} : vector<1x512xf32> to vector<1x128xf32>
    %118 = vector.extract_strided_slice %116 {offsets = [0, 128], sizes = [1, 128], strides = [1, 1]} : vector<1x512xf32> to vector<1x128xf32>
    %119 = vector.extract_strided_slice %116 {offsets = [0, 256], sizes = [1, 128], strides = [1, 1]} : vector<1x512xf32> to vector<1x128xf32>
    %120 = vector.extract_strided_slice %116 {offsets = [0, 384], sizes = [1, 128], strides = [1, 1]} : vector<1x512xf32> to vector<1x128xf32>
    %121 = arith.mulf %118, %106 : vector<1x128xf32>
    %122 = arith.mulf %117, %119 : vector<1x128xf32>
    %123 = arith.addf %121, %122 : vector<1x128xf32>
    %124 = math.tanh %123 : vector<1x128xf32>
    %125 = arith.mulf %120, %124 : vector<1x128xf32>
    %c6_i32 = arith.constant 6 : i32
    %126 = arith.index_cast %c6_i32 : i32 to index
    %c0_26 = arith.constant 0 : index
    %127 = vector.load %arg7[%126, %c0_26] : memref<8x512xf32, #tpu.memory_space<vmem>>, vector<1x512xf32>
    %cst_27 = arith.constant dense<0.000000e+00> : vector<1x512xf32>
    %128 = tpu.matmul %125, %0, %cst_27 {dimension_numbers = #tpu.dot_dimension_numbers<[1], [0], [0], [1], [0, 0, 1, 1], [], []>} : vector<1x128xf32>, vector<128x512xf32>, vector<1x512xf32> -> vector<1x512xf32>
    %129 = arith.addf %127, %128 : vector<1x512xf32>
    %130 = arith.mulf %18, %129 : vector<1x512xf32>
    %131 = math.tanh %130 : vector<1x512xf32>
    %132 = arith.mulf %18, %131 : vector<1x512xf32>
    %133 = arith.addf %132, %21 : vector<1x512xf32>
    %134 = vector.extract_strided_slice %133 {offsets = [0, 0], sizes = [1, 128], strides = [1, 1]} : vector<1x512xf32> to vector<1x128xf32>
    %135 = vector.extract_strided_slice %133 {offsets = [0, 128], sizes = [1, 128], strides = [1, 1]} : vector<1x512xf32> to vector<1x128xf32>
    %136 = vector.extract_strided_slice %133 {offsets = [0, 256], sizes = [1, 128], strides = [1, 1]} : vector<1x512xf32> to vector<1x128xf32>
    %137 = vector.extract_strided_slice %133 {offsets = [0, 384], sizes = [1, 128], strides = [1, 1]} : vector<1x512xf32> to vector<1x128xf32>
    %138 = arith.mulf %135, %123 : vector<1x128xf32>
    %139 = arith.mulf %134, %136 : vector<1x128xf32>
    %140 = arith.addf %138, %139 : vector<1x128xf32>
    %141 = math.tanh %140 : vector<1x128xf32>
    %142 = arith.mulf %137, %141 : vector<1x128xf32>
    %c7_i32 = arith.constant 7 : i32
    %143 = arith.index_cast %c7_i32 : i32 to index
    %c0_28 = arith.constant 0 : index
    %144 = vector.load %arg7[%143, %c0_28] : memref<8x512xf32, #tpu.memory_space<vmem>>, vector<1x512xf32>
    %cst_29 = arith.constant dense<0.000000e+00> : vector<1x512xf32>
    %145 = tpu.matmul %142, %0, %cst_29 {dimension_numbers = #tpu.dot_dimension_numbers<[1], [0], [0], [1], [0, 0, 1, 1], [], []>} : vector<1x128xf32>, vector<128x512xf32>, vector<1x512xf32> -> vector<1x512xf32>
    %146 = arith.addf %144, %145 : vector<1x512xf32>
    %147 = arith.mulf %18, %146 : vector<1x512xf32>
    %148 = math.tanh %147 : vector<1x512xf32>
    %149 = arith.mulf %18, %148 : vector<1x512xf32>
    %150 = arith.addf %149, %21 : vector<1x512xf32>
    %151 = vector.extract_strided_slice %150 {offsets = [0, 0], sizes = [1, 128], strides = [1, 1]} : vector<1x512xf32> to vector<1x128xf32>
    %152 = vector.extract_strided_slice %150 {offsets = [0, 128], sizes = [1, 128], strides = [1, 1]} : vector<1x512xf32> to vector<1x128xf32>
    %153 = vector.extract_strided_slice %150 {offsets = [0, 256], sizes = [1, 128], strides = [1, 1]} : vector<1x512xf32> to vector<1x128xf32>
    %154 = vector.extract_strided_slice %150 {offsets = [0, 384], sizes = [1, 128], strides = [1, 1]} : vector<1x512xf32> to vector<1x128xf32>
    %155 = arith.mulf %152, %140 : vector<1x128xf32>
    %156 = arith.mulf %151, %153 : vector<1x128xf32>
    %157 = arith.addf %155, %156 : vector<1x128xf32>
    %158 = math.tanh %157 : vector<1x128xf32>
    %159 = arith.mulf %154, %158 : vector<1x128xf32>
    %c8_i32 = arith.constant 8 : i32
    %c0_30 = arith.constant 0 : index
    %c0_31 = arith.constant 0 : index
    %160 = vector.load %arg4[%c0_30, %c0_31] : memref<1x128xf32, #tpu.memory_space<vmem>>, vector<1x128xf32>
    %161 = arith.mulf %159, %160 : vector<1x128xf32>
    %162 = vector.shape_cast %161 : vector<1x128xf32> to vector<1x1x128xf32>
    %cst_32 = arith.constant dense<0.000000e+00> : vector<1xf32>
    %163 = vector.multi_reduction <add>, %162, %cst_32 [1, 2] : vector<1x1x128xf32> to vector<1xf32>
    %164 = vector.shape_cast %163 : vector<1xf32> to vector<1x1x1xf32>
    %165 = vector.extract %164[0, 0, 0] : f32 from vector<1x1x1xf32>
    %c0_33 = arith.constant 0 : index
    %166 = memref.load %arg5[%c0_33] : memref<1xf32, #tpu.memory_space<smem>>
    %167 = arith.addf %165, %166 : f32
    %c0_34 = arith.constant 0 : index
    %168 = memref.load %arg6[%c0_34] : memref<1xf32, #tpu.memory_space<smem>>
    memref.store %167, %arg6[%c0_34] : memref<1xf32, #tpu.memory_space<smem>>
    return
  }
}

</mosaic_0001>

<llo_original>
// kernel: tpu_custom_call.1
$region0: #{tpu_custom_call.1}
  #allocation0 [shape = 'u32[]', space=smem, size = 0x4, offset = 0x4, fixed_abs, tag = 'smem constant byte address 0x4 - core index']
  #allocation1 [shape = 'u32[72,128]{1,0:T(1,128)}', space=vmem, size = 0x9000, scoped, tag = 'internal scratch']
  #allocation2 [shape = 'f32[8,512]{1,0:T(8,128)}', space=vmem, size = 0x4000, scoped, tag = 'scratch operand']
  #allocation3 [shape = 'f32[1]{0:T(128)S(6)}', space=smem, size = 0x200, scoped, tag = 'scoped memory for tpu_custom_call.1']
  %s0 = inlined_call_operand.vmem [shape: f32[8,1], index: 0, kind: input, shape index: {}]
  %s1 = inlined_call_operand.vmem [shape: f32[1,512], index: 1, kind: input, shape index: {}]
  %s2 = inlined_call_operand.hbm [shape: f32[128,512], index: 2, kind: input, shape index: {}]
  %s3 = inlined_call_operand.vmem [shape: f32[1,512], index: 3, kind: input, shape index: {}]
  %s4 = inlined_call_operand.vmem [shape: f32[1,128], index: 4, kind: input, shape index: {}]
  %s5 = inlined_call_operand.<no memory space> [shape: f32[1], index: 5, kind: input, shape index: {}]
  %s6 = inlined_call_operand.hbm [shape: f32[1], index: 6, kind: output, shape index: {}]
  %s7 = sld [smem:[#allocation0]]
  $region38: #{tpu_custom_call.1} parent=0
    _
  %s9 = ssub.s32 1, %s7
  %s10 = scalar_select 0, %s9, %s7
  %11 = sst [smem:[#allocation3]] %s5
  $region1: #{tpu_custom_call.1} parent=0
    #allocation4 [shape = 'u8[262144]{0}', space=vmem, size = 0x40000, scoped, tag = 'input window, operand 2, single buffered']
    #allocation5 [shape = 's32[1]{0}', space=sflag, size = 0x4, scoped, tag = 'scoped memory for tpu_custom_call.1']
    #allocation6 [shape = 's32[1]{0}', space=sflag, size = 0x4, scoped, tag = 'scoped memory for tpu_custom_call.1']
    #allocation7 [shape = 'u8[512]{0}', space=smem, size = 0x200, scoped, tag = 'output window, operand 0, single buffered']
    %12 = vsyncpa [#allocation5], 0
    %13 = vsyncpa [#allocation6], 0
    // Predicated region
    $region2: #{tpu_custom_call.1} parent=1 // pred_check
      _
    $region3: #{tpu_custom_call.1} parent=1 // pred_check_branch
      %15 = sbr.rel (0) target = $region5
    $region4: #{tpu_custom_call.1} parent=1 // pred_region
      _
    $region5: #{tpu_custom_call.1} parent=1 // pred_fallthru
      _
    // Predicated region
    $region6: #{tpu_custom_call.1} parent=1 // pred_check
      _
    $region7: #{tpu_custom_call.1} parent=1 // pred_check_branch
      %17 = sbr.rel (0) target = $region9
    $region8: #{tpu_custom_call.1} parent=1 // pred_region
      _
    $region9: #{tpu_custom_call.1} parent=1 // pred_fallthru
      _
    // Predicated region
    $region10: #{tpu_custom_call.1} parent=1 // pred_check
      _
    $region11: #{tpu_custom_call.1} parent=1 // pred_check_branch
      %19 = sbr.rel (0) target = $region13
    $region12: #{tpu_custom_call.1} parent=1 // pred_region
      %21 = vsyncadd [#allocation5], 0
      %s22 = sshll.u32 %s2, 4
      %s23 = int_to_ptr.hbm [resolvable:$true] %s22
      %s24 = sshll.u32 [#allocation4], 4
      %s25 = int_to_ptr.vmem [resolvable:$true] %s24
      %30 = dma.hbm_to_vmem [thread:$0]  %s23, 8192, %s25, [#allocation5], 512, 512, 32
    $region13: #{tpu_custom_call.1} parent=1 // pred_fallthru
      _
    // Predicated region
    $region14: #{tpu_custom_call.1} parent=1 // pred_check
      _
    $region15: #{tpu_custom_call.1} parent=1 // pred_check_branch
      %32 = sbr.rel (0) target = $region17
    $region16: #{tpu_custom_call.1} parent=1 // pred_region
      _
    $region17: #{tpu_custom_call.1} parent=1 // pred_fallthru
      _
    // Predicated region
    $region18: #{tpu_custom_call.1} parent=1 // pred_check
      _
    $region19: #{tpu_custom_call.1} parent=1 // pred_check_branch
      %34 = sbr.rel (0) target = $region21
    $region20: #{tpu_custom_call.1} parent=1 // pred_region
      _
    $region21: #{tpu_custom_call.1} parent=1 // pred_fallthru
      _
    // Predicated region
    $region22: #{tpu_custom_call.1} parent=1 // pred_check
      _
    $region23: #{tpu_custom_call.1} parent=1 // pred_check_branch
      %36 = sbr.rel (0) target = $region25
    $region24: #{tpu_custom_call.1} parent=1 // pred_region
      _
    $region25: #{tpu_custom_call.1} parent=1 // pred_fallthru
      _
    // Predicated region
    $region26: #{tpu_custom_call.1} parent=1 // pred_check
      _
    $region27: #{tpu_custom_call.1} parent=1 // pred_check_branch
      %38 = sbr.rel (0) target = $region29
    $region28: #{tpu_custom_call.1} parent=1 // pred_region
      %40 = dma.done [#allocation5], 8192
    $region29: #{tpu_custom_call.1} parent=1 // pred_fallthru
      _
    %v41 = vld [vmem:[#allocation4] sm:$0xff]
    %v42 = vld [vmem:[#allocation4 + $0x8] sm:$0xff]
    %v43 = vld [vmem:[#allocation4 + $0x10] sm:$0xff]
    %v44 = vld [vmem:[#allocation4 + $0x18] sm:$0xff]
    %v45 = vld [vmem:[#allocation4 + $0x20] sm:$0xff]
    %v46 = vld [vmem:[#allocation4 + $0x28] sm:$0xff]
    %v47 = vld [vmem:[#allocation4 + $0x30] sm:$0xff]
    %v48 = vld [vmem:[#allocation4 + $0x38] sm:$0xff]
    %v49 = vld [vmem:[#allocation4 + $0x40] sm:$0xff]
    %v50 = vld [vmem:[#allocation4 + $0x48] sm:$0xff]
    %v51 = vld [vmem:[#allocation4 + $0x50] sm:$0xff]
    %v52 = vld [vmem:[#allocation4 + $0x58] sm:$0xff]
    %v53 = vld [vmem:[#allocation4 + $0x60] sm:$0xff]
    %v54 = vld [vmem:[#allocation4 + $0x68] sm:$0xff]
    %v55 = vld [vmem:[#allocation4 + $0x70] sm:$0xff]
    %v56 = vld [vmem:[#allocation4 + $0x78] sm:$0xff]
    %v57 = vld [vmem:[#allocation4 + $0x80] sm:$0xff]
    %v58 = vld [vmem:[#allocation4 + $0x88] sm:$0xff]
    %v59 = vld [vmem:[#allocation4 + $0x90] sm:$0xff]
    %v60 = vld [vmem:[#allocation4 + $0x98] sm:$0xff]
    %v61 = vld [vmem:[#allocation4 + $0xa0] sm:$0xff]
    %v62 = vld [vmem:[#allocation4 + $0xa8] sm:$0xff]
    %v63 = vld [vmem:[#allocation4 + $0xb0] sm:$0xff]
    %v64 = vld [vmem:[#allocation4 + $0xb8] sm:$0xff]
    %v65 = vld [vmem:[#allocation4 + $0xc0] sm:$0xff]
    %v66 = vld [vmem:[#allocation4 + $0xc8] sm:$0xff]
    %v67 = vld [vmem:[#allocation4 + $0xd0] sm:$0xff]
    %v68 = vld [vmem:[#allocation4 + $0xd8] sm:$0xff]
    %v69 = vld [vmem:[#allocation4 + $0xe0] sm:$0xff]
    %v70 = vld [vmem:[#allocation4 + $0xe8] sm:$0xff]
    %v71 = vld [vmem:[#allocation4 + $0xf0] sm:$0xff]
    %v72 = vld [vmem:[#allocation4 + $0xf8] sm:$0xff]
    %v73 = vld [vmem:[#allocation4 + $0x100] sm:$0xff]
    %v74 = vld [vmem:[#allocation4 + $0x108] sm:$0xff]
    %v75 = vld [vmem:[#allocation4 + $0x110] sm:$0xff]
    %v76 = vld [vmem:[#allocation4 + $0x118] sm:$0xff]
    %v77 = vld [vmem:[#allocation4 + $0x120] sm:$0xff]
    %v78 = vld [vmem:[#allocation4 + $0x128] sm:$0xff]
    %v79 = vld [vmem:[#allocation4 + $0x130] sm:$0xff]
    %v80 = vld [vmem:[#allocation4 + $0x138] sm:$0xff]
    %v81 = vld [vmem:[#allocation4 + $0x140] sm:$0xff]
    %v82 = vld [vmem:[#allocation4 + $0x148] sm:$0xff]
    %v83 = vld [vmem:[#allocation4 + $0x150] sm:$0xff]
    %v84 = vld [vmem:[#allocation4 + $0x158] sm:$0xff]
    %v85 = vld [vmem:[#allocation4 + $0x160] sm:$0xff]
    %v86 = vld [vmem:[#allocation4 + $0x168] sm:$0xff]
    %v87 = vld [vmem:[#allocation4 + $0x170] sm:$0xff]
    %v88 = vld [vmem:[#allocation4 + $0x178] sm:$0xff]
    %v89 = vld [vmem:[#allocation4 + $0x180] sm:$0xff]
    %v90 = vld [vmem:[#allocation4 + $0x188] sm:$0xff]
    %v91 = vld [vmem:[#allocation4 + $0x190] sm:$0xff]
    %v92 = vld [vmem:[#allocation4 + $0x198] sm:$0xff]
    %v93 = vld [vmem:[#allocation4 + $0x1a0] sm:$0xff]
    %v94 = vld [vmem:[#allocation4 + $0x1a8] sm:$0xff]
    %v95 = vld [vmem:[#allocation4 + $0x1b0] sm:$0xff]
    %v96 = vld [vmem:[#allocation4 + $0x1b8] sm:$0xff]
    %v97 = vld [vmem:[#allocation4 + $0x1c0] sm:$0xff]
    %v98 = vld [vmem:[#allocation4 + $0x1c8] sm:$0xff]
    %v99 = vld [vmem:[#allocation4 + $0x1d0] sm:$0xff]
    %v100 = vld [vmem:[#allocation4 + $0x1d8] sm:$0xff]
    %v101 = vld [vmem:[#allocation4 + $0x1e0] sm:$0xff]
    %v102 = vld [vmem:[#allocation4 + $0x1e8] sm:$0xff]
    %v103 = vld [vmem:[#allocation4 + $0x1f0] sm:$0xff]
    %v104 = vld [vmem:[#allocation4 + $0x1f8] sm:$0xff]
    %v105 = vld [vmem:[%s0] sm:$0xff]
    %v106 = vld [vmem:[%s1] sm:$0xf]
    %108 = vset.pattern.permute.xlu0 0
    %109 = vperm.xlu0 %108, %v105
    %v110 = vpop.permute.xlu0 %109
    %v113 = vperm.slane %v106, 0
    %v114 = vperm.slane %v106, 1
    %v115 = vperm.slane %v106, 2
    %v116 = vperm.slane %v106, 3
    %v121 = vmul.f32 %v110, %v113
    %v122 = vmul.f32 %v110, %v114
    %v123 = vmul.f32 %v110, %v115
    %v124 = vmul.f32 %v110, %v116
    %v125 = vld [vmem:[%s3] sm:$0xf]
    %v127 = vperm.slane %v125, 0
    %v128 = vperm.slane %v125, 1
    %v129 = vperm.slane %v125, 2
    %v130 = vperm.slane %v125, 3
    %v135 = vadd.f32 %v121, %v127
    %v136 = vadd.f32 %v122, %v128
    %v137 = vadd.f32 %v123, %v129
    %v138 = vadd.f32 %v124, %v130
    %139 = vst [vmem:[#allocation2] sm:$0xff] %v135
    %140 = vst [vmem:[#allocation2 + $0x8] sm:$0xff] %v136
    %141 = vst [vmem:[#allocation2 + $0x10] sm:$0xff] %v137
    %142 = vst [vmem:[#allocation2 + $0x18] sm:$0xff] %v138
    %v143 = vlaneseq
    %v144 = vand.u32 %v143, 127
    %v145 = vadd.s32 %v144, 128
    %v146 = vadd.s32 %v144, 256
    %v147 = vadd.s32 %v144, 384
    %vm148 = vcmp.ge.s32.totalorder %v144, 256
    %vm149 = vcmp.ge.s32.totalorder %v145, 256
    %vm150 = vcmp.ge.s32.totalorder %v146, 256
    %vm151 = vcmp.ge.s32.totalorder %v147, 256
    %vm152 = vcmp.lt.s32.totalorder %v144, 384
    %vm153 = vcmp.lt.s32.totalorder %v145, 384
    %vm154 = vcmp.lt.s32.totalorder %v146, 384
    %vm155 = vcmp.lt.s32.totalorder %v147, 384
    %vm156 = vmand %vm148, %vm152
    %vm157 = vmand %vm149, %vm153
    %vm158 = vmand %vm150, %vm154
    %vm159 = vmand %vm151, %vm155
    %v160 = vsel %vm156, 1.0, 0.5
    %v161 = vsel %vm157, 1.0, 0.5
    %v162 = vsel %vm158, 1.0, 0.5
    %v163 = vsel %vm159, 1.0, 0.5
    %v164 = vsel %vm156, 0.0, 0.5
    %v165 = vsel %vm157, 0.0, 0.5
    %v166 = vsel %vm158, 0.0, 0.5
    %v167 = vsel %vm159, 0.0, 0.5
    %v168 = vld [vmem:[#allocation2] ss:$8 sm:$0xf]
    %169 = vmatpush.msra.mxu0 %v101
    %170 = vmatpush.msra.mxu0 %v97
    %171 = vmatpush.msra.mxu0 %v93
    %172 = vmatpush.msra.mxu0 %v89
    %173 = vmatpush.msra.mxu0 %v85
    %174 = vmatpush.msra.mxu0 %v81
    %175 = vmatpush.msra.mxu0 %v77
    %176 = vmatpush.msra.mxu0 %v73
    %177 = vmatpush.msra.mxu0 %v69
    %178 = vmatpush.msra.mxu0 %v65
    %179 = vmatpush.msra.mxu0 %v61
    %180 = vmatpush.msra.mxu0 %v57
    %181 = vmatpush.msra.mxu0 %v53
    %182 = vmatpush.msra.mxu0 %v49
    %183 = vmatpush.msra.mxu0 %v45
    %184 = vmatpush.msra.mxu0 %v41
    %185 = vmatmul.f32.gmra.mxu0 0.0
    %v186 = vpop.f32.mrf.mxu0
    %v187 = vadd.f32 0.0, %v186
    %188 = vdwg.mxu0
    %189 = vmatpush.msra.mxu0 %v102
    %190 = vmatpush.msra.mxu0 %v98
    %191 = vmatpush.msra.mxu0 %v94
    %192 = vmatpush.msra.mxu0 %v90
    %193 = vmatpush.msra.mxu0 %v86
    %194 = vmatpush.msra.mxu0 %v82
    %195 = vmatpush.msra.mxu0 %v78
    %196 = vmatpush.msra.mxu0 %v74
    %197 = vmatpush.msra.mxu0 %v70
    %198 = vmatpush.msra.mxu0 %v66
    %199 = vmatpush.msra.mxu0 %v62
    %200 = vmatpush.msra.mxu0 %v58
    %201 = vmatpush.msra.mxu0 %v54
    %202 = vmatpush.msra.mxu0 %v50
    %203 = vmatpush.msra.mxu0 %v46
    %204 = vmatpush.msra.mxu0 %v42
    %205 = vmatmul.f32.gmra.mxu0 0.0
    %v206 = vpop.f32.mrf.mxu0
    %v207 = vadd.f32 0.0, %v206
    %208 = vdwg.mxu0
    %209 = vmatpush.msra.mxu0 %v103
    %210 = vmatpush.msra.mxu0 %v99
    %211 = vmatpush.msra.mxu0 %v95
    %212 = vmatpush.msra.mxu0 %v91
    %213 = vmatpush.msra.mxu0 %v87
    %214 = vmatpush.msra.mxu0 %v83
    %215 = vmatpush.msra.mxu0 %v79
    %216 = vmatpush.msra.mxu0 %v75
    %217 = vmatpush.msra.mxu0 %v71
    %218 = vmatpush.msra.mxu0 %v67
    %219 = vmatpush.msra.mxu0 %v63
    %220 = vmatpush.msra.mxu0 %v59
    %221 = vmatpush.msra.mxu0 %v55
    %222 = vmatpush.msra.mxu0 %v51
    %223 = vmatpush.msra.mxu0 %v47
    %224 = vmatpush.msra.mxu0 %v43
    %225 = vmatmul.f32.gmra.mxu0 0.0
    %v226 = vpop.f32.mrf.mxu0
    %v227 = vadd.f32 0.0, %v226
    %228 = vdwg.mxu0
    %229 = vmatpush.msra.mxu0 %v104
    %230 = vmatpush.msra.mxu0 %v100
    %231 = vmatpush.msra.mxu0 %v96
    %232 = vmatpush.msra.mxu0 %v92
    %233 = vmatpush.msra.mxu0 %v88
    %234 = vmatpush.msra.mxu0 %v84
    %235 = vmatpush.msra.mxu0 %v80
    %236 = vmatpush.msra.mxu0 %v76
    %237 = vmatpush.msra.mxu0 %v72
    %238 = vmatpush.msra.mxu0 %v68
    %239 = vmatpush.msra.mxu0 %v64
    %240 = vmatpush.msra.mxu0 %v60
    %241 = vmatpush.msra.mxu0 %v56
    %242 = vmatpush.msra.mxu0 %v52
    %243 = vmatpush.msra.mxu0 %v48
    %244 = vmatpush.msra.mxu0 %v44
    %245 = vmatmul.f32.gmra.mxu0 0.0
    %v246 = vpop.f32.mrf.mxu0
    %v247 = vadd.f32 0.0, %v246
    %248 = vdwg.mxu0
    %v253 = vrot.slane %v207, 7
    %v254 = vrot.slane %v227, 6
    %v255 = vrot.slane %v247, 5
    %vm256 = vcmask 1040384
    %v257 = vsel %vm256, %v187, %v253
    %vm258 = vcmask 1042434
    %v259 = vsel %vm258, %v254, %v255
    %vm260 = vcmask 1041408
    %v261 = vsel %vm260, %v257, %v259
    %v263 = vadd.f32 %v168, %v261
    %v265 = vperm.slane %v263, 0
    %v266 = vperm.slane %v263, 1
    %v267 = vperm.slane %v263, 2
    %v268 = vperm.slane %v263, 3
    %v273 = vmul.f32 %v160, %v265
    %v274 = vmul.f32 %v161, %v266
    %v275 = vmul.f32 %v162, %v267
    %v276 = vmul.f32 %v163, %v268
    %v277 = vtanh.pop %v273
    %v278 = vtanh.pop %v274
    %v279 = vtanh.pop %v275
    %v280 = vtanh.pop %v276
    %v281 = vmul.f32 %v160, %v277
    %v282 = vmul.f32 %v161, %v278
    %v283 = vmul.f32 %v162, %v279
    %v284 = vmul.f32 %v163, %v280
    %v285 = vadd.f32 %v281, %v164
    %v286 = vadd.f32 %v282, %v165
    %v287 = vadd.f32 %v283, %v166
    %v288 = vadd.f32 %v284, %v167
    %v289 = vmul.f32 %v286, 0.0
    %v290 = vmul.f32 %v285, %v287
    %v291 = vadd.f32 %v289, %v290
    %v292 = vtanh.pop %v291
    %v293 = vmul.f32 %v288, %v292
    %s294 = scalar_lea.vmem [#allocation2], 1
    %v295 = vld [vmem:[%s294] ss:$8 sm:$0xf]
    %296 = vmatpush.msra.mxu0 %v101
    %297 = vmatpush.msra.mxu0 %v97
    %298 = vmatpush.msra.mxu0 %v93
    %299 = vmatpush.msra.mxu0 %v89
    %300 = vmatpush.msra.mxu0 %v85
    %301 = vmatpush.msra.mxu0 %v81
    %302 = vmatpush.msra.mxu0 %v77
    %303 = vmatpush.msra.mxu0 %v73
    %304 = vmatpush.msra.mxu0 %v69
    %305 = vmatpush.msra.mxu0 %v65
    %306 = vmatpush.msra.mxu0 %v61
    %307 = vmatpush.msra.mxu0 %v57
    %308 = vmatpush.msra.mxu0 %v53
    %309 = vmatpush.msra.mxu0 %v49
    %310 = vmatpush.msra.mxu0 %v45
    %311 = vmatpush.msra.mxu0 %v41
    %312 = vmatmul.f32.gmra.mxu0 %v293
    %v313 = vpop.f32.mrf.mxu0
    %v314 = vadd.f32 0.0, %v313
    %315 = vdwg.mxu0
    %316 = vmatpush.msra.mxu0 %v102
    %317 = vmatpush.msra.mxu0 %v98
    %318 = vmatpush.msra.mxu0 %v94
    %319 = vmatpush.msra.mxu0 %v90
    %320 = vmatpush.msra.mxu0 %v86
    %321 = vmatpush.msra.mxu0 %v82
    %322 = vmatpush.msra.mxu0 %v78
    %323 = vmatpush.msra.mxu0 %v74
    %324 = vmatpush.msra.mxu0 %v70
    %325 = vmatpush.msra.mxu0 %v66
    %326 = vmatpush.msra.mxu0 %v62
    %327 = vmatpush.msra.mxu0 %v58
    %328 = vmatpush.msra.mxu0 %v54
    %329 = vmatpush.msra.mxu0 %v50
    %330 = vmatpush.msra.mxu0 %v46
    %331 = vmatpush.msra.mxu0 %v42
    %332 = vmatmul.f32.gmra.mxu0 %v293
    %v333 = vpop.f32.mrf.mxu0
    %v334 = vadd.f32 0.0, %v333
    %335 = vdwg.mxu0
    %336 = vmatpush.msra.mxu0 %v103
    %337 = vmatpush.msra.mxu0 %v99
    %338 = vmatpush.msra.mxu0 %v95
    %339 = vmatpush.msra.mxu0 %v91
    %340 = vmatpush.msra.mxu0 %v87
    %341 = vmatpush.msra.mxu0 %v83
    %342 = vmatpush.msra.mxu0 %v79
    %343 = vmatpush.msra.mxu0 %v75
    %344 = vmatpush.msra.mxu0 %v71
    %345 = vmatpush.msra.mxu0 %v67
    %346 = vmatpush.msra.mxu0 %v63
    %347 = vmatpush.msra.mxu0 %v59
    %348 = vmatpush.msra.mxu0 %v55
    %349 = vmatpush.msra.mxu0 %v51
    %350 = vmatpush.msra.mxu0 %v47
    %351 = vmatpush.msra.mxu0 %v43
    %352 = vmatmul.f32.gmra.mxu0 %v293
    %v353 = vpop.f32.mrf.mxu0
    %v354 = vadd.f32 0.0, %v353
    %355 = vdwg.mxu0
    %356 = vmatpush.msra.mxu0 %v104
    %357 = vmatpush.msra.mxu0 %v100
    %358 = vmatpush.msra.mxu0 %v96
    %359 = vmatpush.msra.mxu0 %v92
    %360 = vmatpush.msra.mxu0 %v88
    %361 = vmatpush.msra.mxu0 %v84
    %362 = vmatpush.msra.mxu0 %v80
    %363 = vmatpush.msra.mxu0 %v76
    %364 = vmatpush.msra.mxu0 %v72
    %365 = vmatpush.msra.mxu0 %v68
    %366 = vmatpush.msra.mxu0 %v64
    %367 = vmatpush.msra.mxu0 %v60
    %368 = vmatpush.msra.mxu0 %v56
    %369 = vmatpush.msra.mxu0 %v52
    %370 = vmatpush.msra.mxu0 %v48
    %371 = vmatpush.msra.mxu0 %v44
    %372 = vmatmul.f32.gmra.mxu0 %v293
    %v373 = vpop.f32.mrf.mxu0
    %v374 = vadd.f32 0.0, %v373
    %375 = vdwg.mxu0
    %v380 = vrot.slane %v334, 7
    %v381 = vrot.slane %v354, 6
    %v382 = vrot.slane %v374, 5
    %v383 = vsel %vm256, %v314, %v380
    %v384 = vsel %vm258, %v381, %v382
    %v385 = vsel %vm260, %v383, %v384
    %v387 = vadd.f32 %v295, %v385
    %v389 = vperm.slane %v387, 0
    %v390 = vperm.slane %v387, 1
    %v391 = vperm.slane %v387, 2
    %v392 = vperm.slane %v387, 3
    %v397 = vmul.f32 %v160, %v389
    %v398 = vmul.f32 %v161, %v390
    %v399 = vmul.f32 %v162, %v391
    %v400 = vmul.f32 %v163, %v392
    %v401 = vtanh.pop %v397
    %v402 = vtanh.pop %v398
    %v403 = vtanh.pop %v399
    %v404 = vtanh.pop %v400
    %v405 = vmul.f32 %v160, %v401
    %v406 = vmul.f32 %v161, %v402
    %v407 = vmul.f32 %v162, %v403
    %v408 = vmul.f32 %v163, %v404
    %v409 = vadd.f32 %v405, %v164
    %v410 = vadd.f32 %v406, %v165
    %v411 = vadd.f32 %v407, %v166
    %v412 = vadd.f32 %v408, %v167
    %v413 = vmul.f32 %v410, %v291
    %v414 = vmul.f32 %v409, %v411
    %v415 = vadd.f32 %v413, %v414
    %v416 = vtanh.pop %v415
    %v417 = vmul.f32 %v412, %v416
    %s418 = scalar_lea.vmem [#allocation2], 2
    %v419 = vld [vmem:[%s418] ss:$8 sm:$0xf]
    %420 = vmatpush.msra.mxu0 %v101
    %421 = vmatpush.msra.mxu0 %v97
    %422 = vmatpush.msra.mxu0 %v93
    %423 = vmatpush.msra.mxu0 %v89
    %424 = vmatpush.msra.mxu0 %v85
    %425 = vmatpush.msra.mxu0 %v81
    %426 = vmatpush.msra.mxu0 %v77
    %427 = vmatpush.msra.mxu0 %v73
    %428 = vmatpush.msra.mxu0 %v69
    %429 = vmatpush.msra.mxu0 %v65
    %430 = vmatpush.msra.mxu0 %v61
    %431 = vmatpush.msra.mxu0 %v57
    %432 = vmatpush.msra.mxu0 %v53
    %433 = vmatpush.msra.mxu0 %v49
    %434 = vmatpush.msra.mxu0 %v45
    %435 = vmatpush.msra.mxu0 %v41
    %436 = vmatmul.f32.gmra.mxu0 %v417
    %v437 = vpop.f32.mrf.mxu0
    %v438 = vadd.f32 0.0, %v437
    %439 = vdwg.mxu0
    %440 = vmatpush.msra.mxu0 %v102
    %441 = vmatpush.msra.mxu0 %v98
    %442 = vmatpush.msra.mxu0 %v94
    %443 = vmatpush.msra.mxu0 %v90
    %444 = vmatpush.msra.mxu0 %v86
    %445 = vmatpush.msra.mxu0 %v82
    %446 = vmatpush.msra.mxu0 %v78
    %447 = vmatpush.msra.mxu0 %v74
    %448 = vmatpush.msra.mxu0 %v70
    %449 = vmatpush.msra.mxu0 %v66
    %450 = vmatpush.msra.mxu0 %v62
    %451 = vmatpush.msra.mxu0 %v58
    %452 = vmatpush.msra.mxu0 %v54
    %453 = vmatpush.msra.mxu0 %v50
    %454 = vmatpush.msra.mxu0 %v46
    %455 = vmatpush.msra.mxu0 %v42
    %456 = vmatmul.f32.gmra.mxu0 %v417
    %v457 = vpop.f32.mrf.mxu0
    %v458 = vadd.f32 0.0, %v457
    %459 = vdwg.mxu0
    %460 = vmatpush.msra.mxu0 %v103
    %461 = vmatpush.msra.mxu0 %v99
    %462 = vmatpush.msra.mxu0 %v95
    %463 = vmatpush.msra.mxu0 %v91
    %464 = vmatpush.msra.mxu0 %v87
    %465 = vmatpush.msra.mxu0 %v83
    %466 = vmatpush.msra.mxu0 %v79
    %467 = vmatpush.msra.mxu0 %v75
    %468 = vmatpush.msra.mxu0 %v71
    %469 = vmatpush.msra.mxu0 %v67
    %470 = vmatpush.msra.mxu0 %v63
    %471 = vmatpush.msra.mxu0 %v59
    %472 = vmatpush.msra.mxu0 %v55
    %473 = vmatpush.msra.mxu0 %v51
    %474 = vmatpush.msra.mxu0 %v47
    %475 = vmatpush.msra.mxu0 %v43
    %476 = vmatmul.f32.gmra.mxu0 %v417
    %v477 = vpop.f32.mrf.mxu0
    %v478 = vadd.f32 0.0, %v477
    %479 = vdwg.mxu0
    %480 = vmatpush.msra.mxu0 %v104
    %481 = vmatpush.msra.mxu0 %v100
    %482 = vmatpush.msra.mxu0 %v96
    %483 = vmatpush.msra.mxu0 %v92
    %484 = vmatpush.msra.mxu0 %v88
    %485 = vmatpush.msra.mxu0 %v84
    %486 = vmatpush.msra.mxu0 %v80
    %487 = vmatpush.msra.mxu0 %v76
    %488 = vmatpush.msra.mxu0 %v72
    %489 = vmatpush.msra.mxu0 %v68
    %490 = vmatpush.msra.mxu0 %v64
    %491 = vmatpush.msra.mxu0 %v60
    %492 = vmatpush.msra.mxu0 %v56
    %493 = vmatpush.msra.mxu0 %v52
    %494 = vmatpush.msra.mxu0 %v48
    %495 = vmatpush.msra.mxu0 %v44
    %496 = vmatmul.f32.gmra.mxu0 %v417
    %v497 = vpop.f32.mrf.mxu0
    %v498 = vadd.f32 0.0, %v497
    %499 = vdwg.mxu0
    %v504 = vrot.slane %v458, 7
    %v505 = vrot.slane %v478, 6
    %v506 = vrot.slane %v498, 5
    %v507 = vsel %vm256, %v438, %v504
    %v508 = vsel %vm258, %v505, %v506
    %v509 = vsel %vm260, %v507, %v508
    %v511 = vadd.f32 %v419, %v509
    %v513 = vperm.slane %v511, 0
    %v514 = vperm.slane %v511, 1
    %v515 = vperm.slane %v511, 2
    %v516 = vperm.slane %v511, 3
    %v521 = vmul.f32 %v160, %v513
    %v522 = vmul.f32 %v161, %v514
    %v523 = vmul.f32 %v162, %v515
    %v524 = vmul.f32 %v163, %v516
    %v525 = vtanh.pop %v521
    %v526 = vtanh.pop %v522
    %v527 = vtanh.pop %v523
    %v528 = vtanh.pop %v524
    %v529 = vmul.f32 %v160, %v525
    %v530 = vmul.f32 %v161, %v526
    %v531 = vmul.f32 %v162, %v527
    %v532 = vmul.f32 %v163, %v528
    %v533 = vadd.f32 %v529, %v164
    %v534 = vadd.f32 %v530, %v165
    %v535 = vadd.f32 %v531, %v166
    %v536 = vadd.f32 %v532, %v167
    %v537 = vmul.f32 %v534, %v415
    %v538 = vmul.f32 %v533, %v535
    %v539 = vadd.f32 %v537, %v538
    %v540 = vtanh.pop %v539
    %v541 = vmul.f32 %v536, %v540
    %s542 = scalar_lea.vmem [#allocation2], 3
    %v543 = vld [vmem:[%s542] ss:$8 sm:$0xf]
    %544 = vmatpush.msra.mxu0 %v101
    %545 = vmatpush.msra.mxu0 %v97
    %546 = vmatpush.msra.mxu0 %v93
    %547 = vmatpush.msra.mxu0 %v89
    %548 = vmatpush.msra.mxu0 %v85
    %549 = vmatpush.msra.mxu0 %v81
    %550 = vmatpush.msra.mxu0 %v77
    %551 = vmatpush.msra.mxu0 %v73
    %552 = vmatpush.msra.mxu0 %v69
    %553 = vmatpush.msra.mxu0 %v65
    %554 = vmatpush.msra.mxu0 %v61
    %555 = vmatpush.msra.mxu0 %v57
    %556 = vmatpush.msra.mxu0 %v53
    %557 = vmatpush.msra.mxu0 %v49
    %558 = vmatpush.msra.mxu0 %v45
    %559 = vmatpush.msra.mxu0 %v41
    %560 = vmatmul.f32.gmra.mxu0 %v541
    %v561 = vpop.f32.mrf.mxu0
    %v562 = vadd.f32 0.0, %v561
    %563 = vdwg.mxu0
    %564 = vmatpush.msra.mxu0 %v102
    %565 = vmatpush.msra.mxu0 %v98
    %566 = vmatpush.msra.mxu0 %v94
    %567 = vmatpush.msra.mxu0 %v90
    %568 = vmatpush.msra.mxu0 %v86
    %569 = vmatpush.msra.mxu0 %v82
    %570 = vmatpush.msra.mxu0 %v78
    %571 = vmatpush.msra.mxu0 %v74
    %572 = vmatpush.msra.mxu0 %v70
    %573 = vmatpush.msra.mxu0 %v66
    %574 = vmatpush.msra.mxu0 %v62
    %575 = vmatpush.msra.mxu0 %v58
    %576 = vmatpush.msra.mxu0 %v54
    %577 = vmatpush.msra.mxu0 %v50
    %578 = vmatpush.msra.mxu0 %v46
    %579 = vmatpush.msra.mxu0 %v42
    %580 = vmatmul.f32.gmra.mxu0 %v541
    %v581 = vpop.f32.mrf.mxu0
    %v582 = vadd.f32 0.0, %v581
    %583 = vdwg.mxu0
    %584 = vmatpush.msra.mxu0 %v103
    %585 = vmatpush.msra.mxu0 %v99
    %586 = vmatpush.msra.mxu0 %v95
    %587 = vmatpush.msra.mxu0 %v91
    %588 = vmatpush.msra.mxu0 %v87
    %589 = vmatpush.msra.mxu0 %v83
    %590 = vmatpush.msra.mxu0 %v79
    %591 = vmatpush.msra.mxu0 %v75
    %592 = vmatpush.msra.mxu0 %v71
    %593 = vmatpush.msra.mxu0 %v67
    %594 = vmatpush.msra.mxu0 %v63
    %595 = vmatpush.msra.mxu0 %v59
    %596 = vmatpush.msra.mxu0 %v55
    %597 = vmatpush.msra.mxu0 %v51
    %598 = vmatpush.msra.mxu0 %v47
    %599 = vmatpush.msra.mxu0 %v43
    %600 = vmatmul.f32.gmra.mxu0 %v541
    %v601 = vpop.f32.mrf.mxu0
    %v602 = vadd.f32 0.0, %v601
    %603 = vdwg.mxu0
    %604 = vmatpush.msra.mxu0 %v104
    %605 = vmatpush.msra.mxu0 %v100
    %606 = vmatpush.msra.mxu0 %v96
    %607 = vmatpush.msra.mxu0 %v92
    %608 = vmatpush.msra.mxu0 %v88
    %609 = vmatpush.msra.mxu0 %v84
    %610 = vmatpush.msra.mxu0 %v80
    %611 = vmatpush.msra.mxu0 %v76
    %612 = vmatpush.msra.mxu0 %v72
    %613 = vmatpush.msra.mxu0 %v68
    %614 = vmatpush.msra.mxu0 %v64
    %615 = vmatpush.msra.mxu0 %v60
    %616 = vmatpush.msra.mxu0 %v56
    %617 = vmatpush.msra.mxu0 %v52
    %618 = vmatpush.msra.mxu0 %v48
    %619 = vmatpush.msra.mxu0 %v44
    %620 = vmatmul.f32.gmra.mxu0 %v541
    %v621 = vpop.f32.mrf.mxu0
    %v622 = vadd.f32 0.0, %v621
    %623 = vdwg.mxu0
    %v628 = vrot.slane %v582, 7
    %v629 = vrot.slane %v602, 6
    %v630 = vrot.slane %v622, 5
    %v631 = vsel %vm256, %v562, %v628
    %v632 = vsel %vm258, %v629, %v630
    %v633 = vsel %vm260, %v631, %v632
    %v635 = vadd.f32 %v543, %v633
    %v637 = vperm.slane %v635, 0
    %v638 = vperm.slane %v635, 1
    %v639 = vperm.slane %v635, 2
    %v640 = vperm.slane %v635, 3
    %v645 = vmul.f32 %v160, %v637
    %v646 = vmul.f32 %v161, %v638
    %v647 = vmul.f32 %v162, %v639
    %v648 = vmul.f32 %v163, %v640
    %v649 = vtanh.pop %v645
    %v650 = vtanh.pop %v646
    %v651 = vtanh.pop %v647
    %v652 = vtanh.pop %v648
    %v653 = vmul.f32 %v160, %v649
    %v654 = vmul.f32 %v161, %v650
    %v655 = vmul.f32 %v162, %v651
    %v656 = vmul.f32 %v163, %v652
    %v657 = vadd.f32 %v653, %v164
    %v658 = vadd.f32 %v654, %v165
    %v659 = vadd.f32 %v655, %v166
    %v660 = vadd.f32 %v656, %v167
    %v661 = vmul.f32 %v658, %v539
    %v662 = vmul.f32 %v657, %v659
    %v663 = vadd.f32 %v661, %v662
    %v664 = vtanh.pop %v663
    %v665 = vmul.f32 %v660, %v664
    %s666 = scalar_lea.vmem [#allocation2], 4
    %v667 = vld [vmem:[%s666] ss:$8 sm:$0xf]
    %668 = vmatpush.msra.mxu0 %v101
    %669 = vmatpush.msra.mxu0 %v97
    %670 = vmatpush.msra.mxu0 %v93
    %671 = vmatpush.msra.mxu0 %v89
    %672 = vmatpush.msra.mxu0 %v85
    %673 = vmatpush.msra.mxu0 %v81
    %674 = vmatpush.msra.mxu0 %v77
    %675 = vmatpush.msra.mxu0 %v73
    %676 = vmatpush.msra.mxu0 %v69
    %677 = vmatpush.msra.mxu0 %v65
    %678 = vmatpush.msra.mxu0 %v61
    %679 = vmatpush.msra.mxu0 %v57
    %680 = vmatpush.msra.mxu0 %v53
    %681 = vmatpush.msra.mxu0 %v49
    %682 = vmatpush.msra.mxu0 %v45
    %683 = vmatpush.msra.mxu0 %v41
    %684 = vmatmul.f32.gmra.mxu0 %v665
    %v685 = vpop.f32.mrf.mxu0
    %v686 = vadd.f32 0.0, %v685
    %687 = vdwg.mxu0
    %688 = vmatpush.msra.mxu0 %v102
    %689 = vmatpush.msra.mxu0 %v98
    %690 = vmatpush.msra.mxu0 %v94
    %691 = vmatpush.msra.mxu0 %v90
    %692 = vmatpush.msra.mxu0 %v86
    %693 = vmatpush.msra.mxu0 %v82
    %694 = vmatpush.msra.mxu0 %v78
    %695 = vmatpush.msra.mxu0 %v74
    %696 = vmatpush.msra.mxu0 %v70
    %697 = vmatpush.msra.mxu0 %v66
    %698 = vmatpush.msra.mxu0 %v62
    %699 = vmatpush.msra.mxu0 %v58
    %700 = vmatpush.msra.mxu0 %v54
    %701 = vmatpush.msra.mxu0 %v50
    %702 = vmatpush.msra.mxu0 %v46
    %703 = vmatpush.msra.mxu0 %v42
    %704 = vmatmul.f32.gmra.mxu0 %v665
    %v705 = vpop.f32.mrf.mxu0
    %v706 = vadd.f32 0.0, %v705
    %707 = vdwg.mxu0
    %708 = vmatpush.msra.mxu0 %v103
    %709 = vmatpush.msra.mxu0 %v99
    %710 = vmatpush.msra.mxu0 %v95
    %711 = vmatpush.msra.mxu0 %v91
    %712 = vmatpush.msra.mxu0 %v87
    %713 = vmatpush.msra.mxu0 %v83
    %714 = vmatpush.msra.mxu0 %v79
    %715 = vmatpush.msra.mxu0 %v75
    %716 = vmatpush.msra.mxu0 %v71
    %717 = vmatpush.msra.mxu0 %v67
    %718 = vmatpush.msra.mxu0 %v63
    %719 = vmatpush.msra.mxu0 %v59
    %720 = vmatpush.msra.mxu0 %v55
    %721 = vmatpush.msra.mxu0 %v51
    %722 = vmatpush.msra.mxu0 %v47
    %723 = vmatpush.msra.mxu0 %v43
    %724 = vmatmul.f32.gmra.mxu0 %v665
    %v725 = vpop.f32.mrf.mxu0
    %v726 = vadd.f32 0.0, %v725
    %727 = vdwg.mxu0
    %728 = vmatpush.msra.mxu0 %v104
    %729 = vmatpush.msra.mxu0 %v100
    %730 = vmatpush.msra.mxu0 %v96
    %731 = vmatpush.msra.mxu0 %v92
    %732 = vmatpush.msra.mxu0 %v88
    %733 = vmatpush.msra.mxu0 %v84
    %734 = vmatpush.msra.mxu0 %v80
    %735 = vmatpush.msra.mxu0 %v76
    %736 = vmatpush.msra.mxu0 %v72
    %737 = vmatpush.msra.mxu0 %v68
    %738 = vmatpush.msra.mxu0 %v64
    %739 = vmatpush.msra.mxu0 %v60
    %740 = vmatpush.msra.mxu0 %v56
    %741 = vmatpush.msra.mxu0 %v52
    %742 = vmatpush.msra.mxu0 %v48
    %743 = vmatpush.msra.mxu0 %v44
    %744 = vmatmul.f32.gmra.mxu0 %v665
    %v745 = vpop.f32.mrf.mxu0
    %v746 = vadd.f32 0.0, %v745
    %747 = vdwg.mxu0
    %v752 = vrot.slane %v706, 7
    %v753 = vrot.slane %v726, 6
    %v754 = vrot.slane %v746, 5
    %v755 = vsel %vm256, %v686, %v752
    %v756 = vsel %vm258, %v753, %v754
    %v757 = vsel %vm260, %v755, %v756
    %v759 = vadd.f32 %v667, %v757
    %v761 = vperm.slane %v759, 0
    %v762 = vperm.slane %v759, 1
    %v763 = vperm.slane %v759, 2
    %v764 = vperm.slane %v759, 3
    %v769 = vmul.f32 %v160, %v761
    %v770 = vmul.f32 %v161, %v762
    %v771 = vmul.f32 %v162, %v763
    %v772 = vmul.f32 %v163, %v764
    %v773 = vtanh.pop %v769
    %v774 = vtanh.pop %v770
    %v775 = vtanh.pop %v771
    %v776 = vtanh.pop %v772
    %v777 = vmul.f32 %v160, %v773
    %v778 = vmul.f32 %v161, %v774
    %v779 = vmul.f32 %v162, %v775
    %v780 = vmul.f32 %v163, %v776
    %v781 = vadd.f32 %v777, %v164
    %v782 = vadd.f32 %v778, %v165
    %v783 = vadd.f32 %v779, %v166
    %v784 = vadd.f32 %v780, %v167
    %v785 = vmul.f32 %v782, %v663
    %v786 = vmul.f32 %v781, %v783
    %v787 = vadd.f32 %v785, %v786
    %v788 = vtanh.pop %v787
    %v789 = vmul.f32 %v784, %v788
    %s790 = scalar_lea.vmem [#allocation2], 5
    %v791 = vld [vmem:[%s790] ss:$8 sm:$0xf]
    %792 = vmatpush.msra.mxu0 %v101
    %793 = vmatpush.msra.mxu0 %v97
    %794 = vmatpush.msra.mxu0 %v93
    %795 = vmatpush.msra.mxu0 %v89
    %796 = vmatpush.msra.mxu0 %v85
    %797 = vmatpush.msra.mxu0 %v81
    %798 = vmatpush.msra.mxu0 %v77
    %799 = vmatpush.msra.mxu0 %v73
    %800 = vmatpush.msra.mxu0 %v69
    %801 = vmatpush.msra.mxu0 %v65
    %802 = vmatpush.msra.mxu0 %v61
    %803 = vmatpush.msra.mxu0 %v57
    %804 = vmatpush.msra.mxu0 %v53
    %805 = vmatpush.msra.mxu0 %v49
    %806 = vmatpush.msra.mxu0 %v45
    %807 = vmatpush.msra.mxu0 %v41
    %808 = vmatmul.f32.gmra.mxu0 %v789
    %v809 = vpop.f32.mrf.mxu0
    %v810 = vadd.f32 0.0, %v809
    %811 = vdwg.mxu0
    %812 = vmatpush.msra.mxu0 %v102
    %813 = vmatpush.msra.mxu0 %v98
    %814 = vmatpush.msra.mxu0 %v94
    %815 = vmatpush.msra.mxu0 %v90
    %816 = vmatpush.msra.mxu0 %v86
    %817 = vmatpush.msra.mxu0 %v82
    %818 = vmatpush.msra.mxu0 %v78
    %819 = vmatpush.msra.mxu0 %v74
    %820 = vmatpush.msra.mxu0 %v70
    %821 = vmatpush.msra.mxu0 %v66
    %822 = vmatpush.msra.mxu0 %v62
    %823 = vmatpush.msra.mxu0 %v58
    %824 = vmatpush.msra.mxu0 %v54
    %825 = vmatpush.msra.mxu0 %v50
    %826 = vmatpush.msra.mxu0 %v46
    %827 = vmatpush.msra.mxu0 %v42
    %828 = vmatmul.f32.gmra.mxu0 %v789
    %v829 = vpop.f32.mrf.mxu0
    %v830 = vadd.f32 0.0, %v829
    %831 = vdwg.mxu0
    %832 = vmatpush.msra.mxu0 %v103
    %833 = vmatpush.msra.mxu0 %v99
    %834 = vmatpush.msra.mxu0 %v95
    %835 = vmatpush.msra.mxu0 %v91
    %836 = vmatpush.msra.mxu0 %v87
    %837 = vmatpush.msra.mxu0 %v83
    %838 = vmatpush.msra.mxu0 %v79
    %839 = vmatpush.msra.mxu0 %v75
    %840 = vmatpush.msra.mxu0 %v71
    %841 = vmatpush.msra.mxu0 %v67
    %842 = vmatpush.msra.mxu0 %v63
    %843 = vmatpush.msra.mxu0 %v59
    %844 = vmatpush.msra.mxu0 %v55
    %845 = vmatpush.msra.mxu0 %v51
    %846 = vmatpush.msra.mxu0 %v47
    %847 = vmatpush.msra.mxu0 %v43
    %848 = vmatmul.f32.gmra.mxu0 %v789
    %v849 = vpop.f32.mrf.mxu0
    %v850 = vadd.f32 0.0, %v849
    %851 = vdwg.mxu0
    %852 = vmatpush.msra.mxu0 %v104
    %853 = vmatpush.msra.mxu0 %v100
    %854 = vmatpush.msra.mxu0 %v96
    %855 = vmatpush.msra.mxu0 %v92
    %856 = vmatpush.msra.mxu0 %v88
    %857 = vmatpush.msra.mxu0 %v84
    %858 = vmatpush.msra.mxu0 %v80
    %859 = vmatpush.msra.mxu0 %v76
    %860 = vmatpush.msra.mxu0 %v72
    %861 = vmatpush.msra.mxu0 %v68
    %862 = vmatpush.msra.mxu0 %v64
    %863 = vmatpush.msra.mxu0 %v60
    %864 = vmatpush.msra.mxu0 %v56
    %865 = vmatpush.msra.mxu0 %v52
    %866 = vmatpush.msra.mxu0 %v48
    %867 = vmatpush.msra.mxu0 %v44
    %868 = vmatmul.f32.gmra.mxu0 %v789
    %v869 = vpop.f32.mrf.mxu0
    %v870 = vadd.f32 0.0, %v869
    %871 = vdwg.mxu0
    %v876 = vrot.slane %v830, 7
    %v877 = vrot.slane %v850, 6
    %v878 = vrot.slane %v870, 5
    %v879 = vsel %vm256, %v810, %v876
    %v880 = vsel %vm258, %v877, %v878
    %v881 = vsel %vm260, %v879, %v880
    %v883 = vadd.f32 %v791, %v881
    %v885 = vperm.slane %v883, 0
    %v886 = vperm.slane %v883, 1
    %v887 = vperm.slane %v883, 2
    %v888 = vperm.slane %v883, 3
    %v893 = vmul.f32 %v160, %v885
    %v894 = vmul.f32 %v161, %v886
    %v895 = vmul.f32 %v162, %v887
    %v896 = vmul.f32 %v163, %v888
    %v897 = vtanh.pop %v893
    %v898 = vtanh.pop %v894
    %v899 = vtanh.pop %v895
    %v900 = vtanh.pop %v896
    %v901 = vmul.f32 %v160, %v897
    %v902 = vmul.f32 %v161, %v898
    %v903 = vmul.f32 %v162, %v899
    %v904 = vmul.f32 %v163, %v900
    %v905 = vadd.f32 %v901, %v164
    %v906 = vadd.f32 %v902, %v165
    %v907 = vadd.f32 %v903, %v166
    %v908 = vadd.f32 %v904, %v167
    %v909 = vmul.f32 %v906, %v787
    %v910 = vmul.f32 %v905, %v907
    %v911 = vadd.f32 %v909, %v910
    %v912 = vtanh.pop %v911
    %v913 = vmul.f32 %v908, %v912
    %s914 = scalar_lea.vmem [#allocation2], 6
    %v915 = vld [vmem:[%s914] ss:$8 sm:$0xf]
    %916 = vmatpush.msra.mxu0 %v101
    %917 = vmatpush.msra.mxu0 %v97
    %918 = vmatpush.msra.mxu0 %v93
    %919 = vmatpush.msra.mxu0 %v89
    %920 = vmatpush.msra.mxu0 %v85
    %921 = vmatpush.msra.mxu0 %v81
    %922 = vmatpush.msra.mxu0 %v77
    %923 = vmatpush.msra.mxu0 %v73
    %924 = vmatpush.msra.mxu0 %v69
    %925 = vmatpush.msra.mxu0 %v65
    %926 = vmatpush.msra.mxu0 %v61
    %927 = vmatpush.msra.mxu0 %v57
    %928 = vmatpush.msra.mxu0 %v53
    %929 = vmatpush.msra.mxu0 %v49
    %930 = vmatpush.msra.mxu0 %v45
    %931 = vmatpush.msra.mxu0 %v41
    %932 = vmatmul.f32.gmra.mxu0 %v913
    %v933 = vpop.f32.mrf.mxu0
    %v934 = vadd.f32 0.0, %v933
    %935 = vdwg.mxu0
    %936 = vmatpush.msra.mxu0 %v102
    %937 = vmatpush.msra.mxu0 %v98
    %938 = vmatpush.msra.mxu0 %v94
    %939 = vmatpush.msra.mxu0 %v90
    %940 = vmatpush.msra.mxu0 %v86
    %941 = vmatpush.msra.mxu0 %v82
    %942 = vmatpush.msra.mxu0 %v78
    %943 = vmatpush.msra.mxu0 %v74
    %944 = vmatpush.msra.mxu0 %v70
    %945 = vmatpush.msra.mxu0 %v66
    %946 = vmatpush.msra.mxu0 %v62
    %947 = vmatpush.msra.mxu0 %v58
    %948 = vmatpush.msra.mxu0 %v54
    %949 = vmatpush.msra.mxu0 %v50
    %950 = vmatpush.msra.mxu0 %v46
    %951 = vmatpush.msra.mxu0 %v42
    %952 = vmatmul.f32.gmra.mxu0 %v913
    %v953 = vpop.f32.mrf.mxu0
    %v954 = vadd.f32 0.0, %v953
    %955 = vdwg.mxu0
    %956 = vmatpush.msra.mxu0 %v103
    %957 = vmatpush.msra.mxu0 %v99
    %958 = vmatpush.msra.mxu0 %v95
    %959 = vmatpush.msra.mxu0 %v91
    %960 = vmatpush.msra.mxu0 %v87
    %961 = vmatpush.msra.mxu0 %v83
    %962 = vmatpush.msra.mxu0 %v79
    %963 = vmatpush.msra.mxu0 %v75
    %964 = vmatpush.msra.mxu0 %v71
    %965 = vmatpush.msra.mxu0 %v67
    %966 = vmatpush.msra.mxu0 %v63
    %967 = vmatpush.msra.mxu0 %v59
    %968 = vmatpush.msra.mxu0 %v55
    %969 = vmatpush.msra.mxu0 %v51
    %970 = vmatpush.msra.mxu0 %v47
    %971 = vmatpush.msra.mxu0 %v43
    %972 = vmatmul.f32.gmra.mxu0 %v913
    %v973 = vpop.f32.mrf.mxu0
    %v974 = vadd.f32 0.0, %v973
    %975 = vdwg.mxu0
    %976 = vmatpush.msra.mxu0 %v104
    %977 = vmatpush.msra.mxu0 %v100
    %978 = vmatpush.msra.mxu0 %v96
    %979 = vmatpush.msra.mxu0 %v92
    %980 = vmatpush.msra.mxu0 %v88
    %981 = vmatpush.msra.mxu0 %v84
    %982 = vmatpush.msra.mxu0 %v80
    %983 = vmatpush.msra.mxu0 %v76
    %984 = vmatpush.msra.mxu0 %v72
    %985 = vmatpush.msra.mxu0 %v68
    %986 = vmatpush.msra.mxu0 %v64
    %987 = vmatpush.msra.mxu0 %v60
    %988 = vmatpush.msra.mxu0 %v56
    %989 = vmatpush.msra.mxu0 %v52
    %990 = vmatpush.msra.mxu0 %v48
    %991 = vmatpush.msra.mxu0 %v44
    %992 = vmatmul.f32.gmra.mxu0 %v913
    %v993 = vpop.f32.mrf.mxu0
    %v994 = vadd.f32 0.0, %v993
    %995 = vdwg.mxu0
    %v1000 = vrot.slane %v954, 7
    %v1001 = vrot.slane %v974, 6
    %v1002 = vrot.slane %v994, 5
    %v1003 = vsel %vm256, %v934, %v1000
    %v1004 = vsel %vm258, %v1001, %v1002
    %v1005 = vsel %vm260, %v1003, %v1004
    %v1007 = vadd.f32 %v915, %v1005
    %v1009 = vperm.slane %v1007, 0
    %v1010 = vperm.slane %v1007, 1
    %v1011 = vperm.slane %v1007, 2
    %v1012 = vperm.slane %v1007, 3
    %v1017 = vmul.f32 %v160, %v1009
    %v1018 = vmul.f32 %v161, %v1010
    %v1019 = vmul.f32 %v162, %v1011
    %v1020 = vmul.f32 %v163, %v1012
    %v1021 = vtanh.pop %v1017
    %v1022 = vtanh.pop %v1018
    %v1023 = vtanh.pop %v1019
    %v1024 = vtanh.pop %v1020
    %v1025 = vmul.f32 %v160, %v1021
    %v1026 = vmul.f32 %v161, %v1022
    %v1027 = vmul.f32 %v162, %v1023
    %v1028 = vmul.f32 %v163, %v1024
    %v1029 = vadd.f32 %v1025, %v164
    %v1030 = vadd.f32 %v1026, %v165
    %v1031 = vadd.f32 %v1027, %v166
    %v1032 = vadd.f32 %v1028, %v167
    %v1033 = vmul.f32 %v1030, %v911
    %v1034 = vmul.f32 %v1029, %v1031
    %v1035 = vadd.f32 %v1033, %v1034
    %v1036 = vtanh.pop %v1035
    %v1037 = vmul.f32 %v1032, %v1036
    %s1038 = scalar_lea.vmem [#allocation2], 7
    %v1039 = vld [vmem:[%s1038] ss:$8 sm:$0xf]
    %1040 = vmatpush.msra.mxu0 %v101
    %1041 = vmatpush.msra.mxu0 %v97
    %1042 = vmatpush.msra.mxu0 %v93
    %1043 = vmatpush.msra.mxu0 %v89
    %1044 = vmatpush.msra.mxu0 %v85
    %1045 = vmatpush.msra.mxu0 %v81
    %1046 = vmatpush.msra.mxu0 %v77
    %1047 = vmatpush.msra.mxu0 %v73
    %1048 = vmatpush.msra.mxu0 %v69
    %1049 = vmatpush.msra.mxu0 %v65
    %1050 = vmatpush.msra.mxu0 %v61
    %1051 = vmatpush.msra.mxu0 %v57
    %1052 = vmatpush.msra.mxu0 %v53
    %1053 = vmatpush.msra.mxu0 %v49
    %1054 = vmatpush.msra.mxu0 %v45
    %1055 = vmatpush.msra.mxu0 %v41
    %1056 = vmatmul.f32.gmra.mxu0 %v1037
    %v1057 = vpop.f32.mrf.mxu0
    %v1058 = vadd.f32 0.0, %v1057
    %1059 = vdwg.mxu0
    %1060 = vmatpush.msra.mxu0 %v102
    %1061 = vmatpush.msra.mxu0 %v98
    %1062 = vmatpush.msra.mxu0 %v94
    %1063 = vmatpush.msra.mxu0 %v90
    %1064 = vmatpush.msra.mxu0 %v86
    %1065 = vmatpush.msra.mxu0 %v82
    %1066 = vmatpush.msra.mxu0 %v78
    %1067 = vmatpush.msra.mxu0 %v74
    %1068 = vmatpush.msra.mxu0 %v70
    %1069 = vmatpush.msra.mxu0 %v66
    %1070 = vmatpush.msra.mxu0 %v62
    %1071 = vmatpush.msra.mxu0 %v58
    %1072 = vmatpush.msra.mxu0 %v54
    %1073 = vmatpush.msra.mxu0 %v50
    %1074 = vmatpush.msra.mxu0 %v46
    %1075 = vmatpush.msra.mxu0 %v42
    %1076 = vmatmul.f32.gmra.mxu0 %v1037
    %v1077 = vpop.f32.mrf.mxu0
    %v1078 = vadd.f32 0.0, %v1077
    %1079 = vdwg.mxu0
    %1080 = vmatpush.msra.mxu0 %v103
    %1081 = vmatpush.msra.mxu0 %v99
    %1082 = vmatpush.msra.mxu0 %v95
    %1083 = vmatpush.msra.mxu0 %v91
    %1084 = vmatpush.msra.mxu0 %v87
    %1085 = vmatpush.msra.mxu0 %v83
    %1086 = vmatpush.msra.mxu0 %v79
    %1087 = vmatpush.msra.mxu0 %v75
    %1088 = vmatpush.msra.mxu0 %v71
    %1089 = vmatpush.msra.mxu0 %v67
    %1090 = vmatpush.msra.mxu0 %v63
    %1091 = vmatpush.msra.mxu0 %v59
    %1092 = vmatpush.msra.mxu0 %v55
    %1093 = vmatpush.msra.mxu0 %v51
    %1094 = vmatpush.msra.mxu0 %v47
    %1095 = vmatpush.msra.mxu0 %v43
    %1096 = vmatmul.f32.gmra.mxu0 %v1037
    %v1097 = vpop.f32.mrf.mxu0
    %v1098 = vadd.f32 0.0, %v1097
    %1099 = vdwg.mxu0
    %1100 = vmatpush.msra.mxu0 %v104
    %1101 = vmatpush.msra.mxu0 %v100
    %1102 = vmatpush.msra.mxu0 %v96
    %1103 = vmatpush.msra.mxu0 %v92
    %1104 = vmatpush.msra.mxu0 %v88
    %1105 = vmatpush.msra.mxu0 %v84
    %1106 = vmatpush.msra.mxu0 %v80
    %1107 = vmatpush.msra.mxu0 %v76
    %1108 = vmatpush.msra.mxu0 %v72
    %1109 = vmatpush.msra.mxu0 %v68
    %1110 = vmatpush.msra.mxu0 %v64
    %1111 = vmatpush.msra.mxu0 %v60
    %1112 = vmatpush.msra.mxu0 %v56
    %1113 = vmatpush.msra.mxu0 %v52
    %1114 = vmatpush.msra.mxu0 %v48
    %1115 = vmatpush.msra.mxu0 %v44
    %1116 = vmatmul.f32.gmra.mxu0 %v1037
    %v1117 = vpop.f32.mrf.mxu0
    %v1118 = vadd.f32 0.0, %v1117
    %1119 = vdwg.mxu0
    %v1124 = vrot.slane %v1078, 7
    %v1125 = vrot.slane %v1098, 6
    %v1126 = vrot.slane %v1118, 5
    %v1127 = vsel %vm256, %v1058, %v1124
    %v1128 = vsel %vm258, %v1125, %v1126
    %v1129 = vsel %vm260, %v1127, %v1128
    %v1131 = vadd.f32 %v1039, %v1129
    %v1133 = vperm.slane %v1131, 0
    %v1134 = vperm.slane %v1131, 1
    %v1135 = vperm.slane %v1131, 2
    %v1136 = vperm.slane %v1131, 3
    %v1141 = vmul.f32 %v160, %v1133
    %v1142 = vmul.f32 %v161, %v1134
    %v1143 = vmul.f32 %v162, %v1135
    %v1144 = vmul.f32 %v163, %v1136
    %v1145 = vtanh.pop %v1141
    %v1146 = vtanh.pop %v1142
    %v1147 = vtanh.pop %v1143
    %v1148 = vtanh.pop %v1144
    %v1149 = vmul.f32 %v160, %v1145
    %v1150 = vmul.f32 %v161, %v1146
    %v1151 = vmul.f32 %v162, %v1147
    %v1152 = vmul.f32 %v163, %v1148
    %v1153 = vadd.f32 %v1149, %v164
    %v1154 = vadd.f32 %v1150, %v165
    %v1155 = vadd.f32 %v1151, %v166
    %v1156 = vadd.f32 %v1152, %v167
    %v1157 = vmul.f32 %v1154, %v1035
    %v1158 = vmul.f32 %v1153, %v1155
    %v1159 = vadd.f32 %v1157, %v1158
    %v1160 = vtanh.pop %v1159
    %v1161 = vmul.f32 %v1156, %v1160
    %v1162 = vld [vmem:[%s4] sm:$0x1]
    %v1163 = vmul.f32 %v1161, %v1162
    %v1164 = vsel %vm256, %v1163, 0.0
    %1165 = vadd.xlane.f32.xlu0 %v1164
    %v1166 = vpop.xlane.xlu0 %1165
    %v1167 = vrot.slane %v1166, 4
    %v1168 = vadd.f32 %v1166, %v1167
    %v1169 = vrot.slane %v1168, 2
    %v1170 = vadd.f32 %v1168, %v1169
    %v1171 = vrot.slane %v1170, 1
    %v1172 = vadd.f32 %v1170, %v1171
    %s1173 = vtos %v1172
    %s1174 = sld [smem:[#allocation3]]
    %s1175 = sadd.f32 %s1173, %s1174
    %s1176 = scalar_lea.smem [#allocation7], 0
    %1177 = sst [smem:[%s1176]] %s1175
    // Predicated region
    $region30: #{tpu_custom_call.1} parent=1 // pred_check
      _
    $region31: #{tpu_custom_call.1} parent=1 // pred_check_branch
      %1179 = sbr.rel (0) target = $region33
    $region32: #{tpu_custom_call.1} parent=1 // pred_region
      %1181 = vsyncadd [#allocation6], 0
      %s1183 = sshll.u32 %s6, 4
      %s1184 = int_to_ptr.hbm [resolvable:$true] %s1183
      %1186 = dma.smem_to_hbm [#allocation7], 16, %s1184, [#allocation6]
    $region33: #{tpu_custom_call.1} parent=1 // pred_fallthru
      _
    // Predicated region
    $region34: #{tpu_custom_call.1} parent=1 // pred_check
      _
    $region35: #{tpu_custom_call.1} parent=1 // pred_check_branch
      %1188 = sbr.rel (0) target = $region37
    $region36: #{tpu_custom_call.1} parent=1 // pred_region
      %1190 = dma.done [#allocation6], 16
    $region37: #{tpu_custom_call.1} parent=1 // pred_fallthru
      _
    %1191 = sfence
    %1192 = vsyncpa [#allocation5], 1
    %1193 = vsyncpa [#allocation6], 1

</llo_original>
